<compile_context>
chip_gen: v7x
topology: tpu7x:2x2x1
jax: 0.10.0
libtpu: 0.0.40
codegen_flags: <defaults>
</compile_context>

<pallas_src>
import functools

import jax
import jax.numpy as jnp
from jax import lax
from jax.experimental import pallas as pl
from jax.experimental.pallas import tpu as pltpu

ATTN_LEN = 50      # nn.Linear(hidden_sz + embed_sz, 50) -> fixed attention span
LANE = 128         # pad every feature axis to the 128-lane vreg width
NEG = -1e30        # effective -inf for padded softmax lanes


def _decoder_kernel(n_layers, hidden_sz, T,
                    tok_ref,      # SMEM (T,) int32              (scalar prefetch)
                    emb_ref,      # VMEM (vocab, 1, LANE)         padded embedding table
                    state0_ref,   # VMEM (2*n_layers, LANE)       initial [h..., c...]
                    enc_ref,      # VMEM (LANE, LANE)             padded encoder outputs
                    w_ref,        # VMEM (LANE, (5+n_layers)*LANE) packed weights (K=128)
                    b_ref,        # VMEM (n_layers+2, 2*LANE)     packed biases
                    misc_ref,     # OUT  (T_pad, 2*LANE)          per-step [logp | attn_w]
                    state_ref,    # OUT  (2*n_layers, LANE)       final [h..., c...]
                    emb_buf,      # VMEM scratch (T_pad, LANE)    gathered embeddings
                    pre_ref):     # VMEM scratch (T_pad, 2*LANE)  hoisted emb matmul result
    L = LANE
    H = hidden_sz

    # carried h/c state lives in the (VMEM-resident) output block for the whole kernel
    state_ref[...] = state0_ref[...]

    # ---- gather all T embedding rows (T is a small trace-time constant) ----
    emb_buf[...] = jnp.zeros_like(emb_buf)
    for i in range(T):
        emb_buf[i:i + 1, :] = emb_ref[tok_ref[i]]

    # ---- hoisted, batched embedding matmul: one (T_pad,128)x(128,256) MXU push ----
    # row t = [ emb_t @ W_attn_emb + b_attn (padded lanes -1e30) |
    #           emb_t @ W_comb_emb + b_comb ]
    pre_ref[...] = (jnp.dot(emb_buf[...], w_ref[:, 0:2 * L],
                            preferred_element_type=jnp.float32)
                    + b_ref[0:1, :])

    # lane mask (1 for lanes < H) keeps padded c lanes exactly 0 after dense gate extract
    lane = lax.broadcasted_iota(jnp.int32, (1, L), 1)
    hmask = (lane < H).astype(jnp.float32)

    # hoist loop-invariant bias rows out of the time loop
    b_gate = [b_ref[l + 1:l + 2, 0:L] for l in range(n_layers)]
    b_out = b_ref[n_layers + 1:n_layers + 2, 0:L]

    @pl.loop(0, T)
    def _step(t):
        pre = pre_ref[pl.ds(t, 1), :]                         # (1, 2*LANE)
        pre_attn = pre[:, 0:L]
        pre_comb = pre[:, L:2 * L]

        # attention scores: precomputed emb part + h0 part (single K=128 push)
        h0 = state_ref[0:1, :]
        scores = pre_attn + jnp.dot(h0, w_ref[:, 2 * L:3 * L],
                                    preferred_element_type=jnp.float32)
        m = jnp.max(scores, axis=1, keepdims=True)
        ex = jnp.exp(scores - m)                              # padded lanes -> exp(-1e30)=0
        attn_w = ex * pl.reciprocal(jnp.sum(ex, axis=1, keepdims=True), approx=True)

        # attn_applied = attn_w @ encoder_outputs ; finish attn_combine
        attn_applied = jnp.dot(attn_w, enc_ref[...],
                               preferred_element_type=jnp.float32)
        x = pre_comb + jnp.dot(attn_applied, w_ref[:, 3 * L:4 * L],
                               preferred_element_type=jnp.float32)

        # ---- stacked LSTM: K=128 packed [x | h_prev], dense [i|f|g|o] gate columns ----
        for l in range(n_layers):
            h_prev = state_ref[l:l + 1, :]                    # values in lanes 0:H
            c_prev = state_ref[n_layers + l:n_layers + l + 1, :]
            xh = x + pltpu.roll(h_prev, H, axis=1)            # x in lanes 0:H, h in H:2H
            c0 = (4 + l) * L
            gates = (jnp.dot(xh, w_ref[:, c0:c0 + L],
                             preferred_element_type=jnp.float32)
                     + b_gate[l])                             # (1,128) = [i|f|g|o]
            i_g = jax.nn.sigmoid(gates)                       # valid in lanes 0:H
            f_g = jax.nn.sigmoid(pltpu.roll(gates, L - H, axis=1))
            g_g = jnp.tanh(pltpu.roll(gates, L - 2 * H, axis=1))
            o_g = jax.nn.sigmoid(pltpu.roll(gates, L - 3 * H, axis=1))
            c_new = f_g * c_prev + hmask * (i_g * g_g)        # padded lanes stay exactly 0
            h_new = o_g * jnp.tanh(c_new)                     # padded: finite * tanh(0) = 0
            state_ref[l:l + 1, :] = h_new
            state_ref[n_layers + l:n_layers + l + 1, :] = c_new
            x = h_new                  # no inter-layer dropout (dropout = 0.0 / eval)

        # ---- output projection + log_softmax (padded vocab lanes masked via -1e30 bias) ----
        co = (4 + n_layers) * L
        logits = (jnp.dot(x, w_ref[:, co:co + L],
                          preferred_element_type=jnp.float32) + b_out)
        m2 = jnp.max(logits, axis=1, keepdims=True)
        sh = logits - m2
        lse = jnp.log(jnp.sum(jnp.exp(sh), axis=1, keepdims=True))
        misc_ref[pl.ds(t, 1), 0:L] = sh - lse
        misc_ref[pl.ds(t, 1), L:2 * L] = attn_w


def pack_params(p, n_layers, embed_sz, hidden_sz):
    """One-time packing of all module weights into a single K=128 weight slab + bias slab."""
    E, H, A, L = embed_sz, hidden_sz, ATTN_LEN, LANE
    assert E <= L and 4 * H <= L and A <= L
    vocab = p['embedding'].shape[0]
    out_sz = p['w_out'].shape[1]

    emb_tab = jnp.zeros((vocab, 1, L), jnp.float32).at[:, 0, :E].set(p['embedding'])

    w = jnp.zeros((L, (5 + n_layers) * L), jnp.float32)
    # cols 0:2L — hoisted emb precompute: [emb -> attn scores | emb -> combine]
    w = w.at[0:E, 0:A].set(p['w_attn'][0:E])
    w = w.at[0:E, L:L + H].set(p['w_comb'][0:E])
    # cols 2L:3L — h0 -> attention scores
    w = w.at[0:H, 2 * L:2 * L + A].set(p['w_attn'][E:])
    # cols 3L:4L — attn_applied -> combine
    w = w.at[0:H, 3 * L:3 * L + H].set(p['w_comb'][E:])
    # cols (4+l)L:(5+l)L — LSTM layer l, dense [i|f|g|o] gates; x rows 0:H, h rows H:2H
    for l in range(n_layers):
        c0 = (4 + l) * L
        w = w.at[0:H, c0:c0 + 4 * H].set(p['w_ih'][l])
        w = w.at[H:2 * H, c0:c0 + 4 * H].set(p['w_hh'][l])
    # last L cols — output projection
    co = (4 + n_layers) * L
    w = w.at[0:H, co:co + out_sz].set(p['w_out'])

    b = jnp.zeros((n_layers + 2, 2 * L), jnp.float32)
    b = b.at[0, 0:A].set(p['b_attn'][0])
    b = b.at[0, A:L].set(NEG)                           # mask padded attention lanes
    b = b.at[0, L:L + H].set(p['b_comb'][0])
    for l in range(n_layers):
        b = b.at[l + 1, 0:4 * H].set(p['b_lstm'][l][0])
    b = b.at[n_layers + 1, 0:out_sz].set(p['b_out'][0])
    b = b.at[n_layers + 1, out_sz:L].set(NEG)           # mask padded vocab lanes
    return {'emb_tab': emb_tab, 'w': w, 'b': b}


@jax.jit
def attention_decoder_decode(tok_seq, hidden, cell, encoder_outputs, packed):
    """Runs T teacher-forced decode steps entirely inside ONE pallas_call / ONE grid step.
    Returns per-step (logp, attn_w) and the final (hidden, cell)."""
    T = tok_seq.shape[0]
    n_layers, _, H = hidden.shape
    out_sz = packed['emb_tab'].shape[0]
    L = LANE
    T_pad = ((T + 7) // 8) * 8

    # zero-padded state / encoder layouts (padded lanes provably stay 0 in the kernel)
    state0 = jnp.zeros((2 * n_layers, L), jnp.float32)
    state0 = state0.at[:n_layers, :H].set(hidden[:, 0, :])
    state0 = state0.at[n_layers:, :H].set(cell[:, 0, :])
    enc_p = jnp.zeros((L, L), jnp.float32).at[:ATTN_LEN, :H].set(encoder_outputs)

    kernel = functools.partial(_decoder_kernel, n_layers, H, T)

    grid_spec = pltpu.PrefetchScalarGridSpec(
        num_scalar_prefetch=1,
        grid=(1,),
        in_specs=[
            pl.BlockSpec(packed['emb_tab'].shape, lambda i, tok: (0, 0, 0)),
            pl.BlockSpec(state0.shape, lambda i, tok: (0, 0)),
            pl.BlockSpec(enc_p.shape, lambda i, tok: (0, 0)),
            pl.BlockSpec(packed['w'].shape, lambda i, tok: (0, 0)),
            pl.BlockSpec(packed['b'].shape, lambda i, tok: (0, 0)),
        ],
        out_specs=(
            pl.BlockSpec((T_pad, 2 * L), lambda i, tok: (0, 0)),
            pl.BlockSpec((2 * n_layers, L), lambda i, tok: (0, 0)),
        ),
        scratch_shapes=[
            pltpu.VMEM((T_pad, L), jnp.float32),        # gathered embeddings
            pltpu.VMEM((T_pad, 2 * L), jnp.float32),    # hoisted emb matmul result
        ],
    )

    misc, state = pl.pallas_call(
        kernel,
        grid_spec=grid_spec,
        out_shape=(jax.ShapeDtypeStruct((T_pad, 2 * L), jnp.float32),
                   jax.ShapeDtypeStruct((2 * n_layers, L), jnp.float32)),
        compiler_params=pltpu.CompilerParams(
            dimension_semantics=("arbitrary",)),
    )(tok_seq.astype(jnp.int32), packed['emb_tab'], state0, enc_p,
      packed['w'], packed['b'])

    logp = misc[:T, 0:out_sz]                  # (T, out_sz)
    attn_w = misc[:T, L:L + ATTN_LEN]          # (T, 50)
    h_new = state[:n_layers, :H][:, None, :]   # (n_layers, 1, H)
    c_new = state[n_layers:, :H][:, None, :]
    return logp, h_new, c_new, attn_w


def attention_decoder_forward(input_idx, hidden, cell, encoder_outputs, packed):
    """Exact semantics of AttentionDecoder.forward (cell_type='LSTM', dropout inactive)."""
    tok = jnp.asarray(input_idx, jnp.int32).reshape(1)
    logp, h_new, c_new, attn_w = attention_decoder_decode(
        tok, hidden, cell, encoder_outputs, packed)
    return logp[0:1], h_new, c_new, attn_w[0:1]


def _reference(input_idx, hidden, cell, enc, p):
    """Pure-JAX reference of the same forward pass (for correctness checks)."""
    emb = p['embedding'][input_idx].reshape(1, -1)
    H = hidden.shape[2]
    scores = jnp.concatenate([emb, hidden[0]], axis=1) @ p['w_attn'] + p['b_attn']
    aw = jax.nn.softmax(scores, axis=1)
    applied = aw @ enc
    x = jnp.concatenate([emb, applied], axis=1) @ p['w_comb'] + p['b_comb']
    hs, cs = [], []
    for l in range(hidden.shape[0]):
        gates = x @ p['w_ih'][l] + hidden[l] @ p['w_hh'][l] + p['b_lstm'][l]
        i = jax.nn.sigmoid(gates[:, :H])
        f = jax.nn.sigmoid(gates[:, H:2 * H])
        g = jnp.tanh(gates[:, 2 * H:3 * H])
        o = jax.nn.sigmoid(gates[:, 3 * H:4 * H])
        c_new = f * cell[l] + i * g
        h_new = o * jnp.tanh(c_new)
        hs.append(h_new)
        cs.append(c_new)
        x = h_new
    logits = x @ p['w_out'] + p['b_out']
    return jax.nn.log_softmax(logits, axis=1), jnp.stack(hs), jnp.stack(cs), aw


def make_params(key, out_sz, embed_sz, hidden_sz, n_layers):
    """Deterministic synthetic parameters (weights already transposed for x @ W)."""
    ks = jax.random.split(key, 10)
    s = 0.1
    E, H = embed_sz, hidden_sz
    return {
        'embedding': s * jax.random.normal(ks[0], (out_sz, E), jnp.float32),
        'w_attn':    s * jax.random.normal(ks[1], (E + H, ATTN_LEN), jnp.float32),
        'b_attn':    s * jax.random.normal(ks[2], (1, ATTN_LEN), jnp.float32),
        'w_comb':    s * jax.random.normal(ks[3], (E + H, H), jnp.float32),
        'b_comb':    s * jax.random.normal(ks[4], (1, H), jnp.float32),
        'w_ih':      s * jax.random.normal(ks[5], (n_layers, H, 4 * H), jnp.float32),
        'w_hh':      s * jax.random.normal(ks[6], (n_layers, H, 4 * H), jnp.float32),
        'b_lstm':    s * jax.random.normal(ks[7], (n_layers, 1, 4 * H), jnp.float32),
        'w_out':     s * jax.random.normal(ks[8], (H, out_sz), jnp.float32),
        'b_out':     s * jax.random.normal(ks[9], (1, out_sz), jnp.float32),
    }


if __name__ == "__main__":
    out_sz, embed_sz, hidden_sz, n_layers = 20, 16, 32, 2   # cell_type='LSTM', dropout=0.0

    key = jax.random.PRNGKey(0)
    kp, kh, kc, ke, kt = jax.random.split(key, 5)

    params = make_params(kp, out_sz, embed_sz, hidden_sz, n_layers)
    packed = pack_params(params, n_layers, embed_sz, hidden_sz)   # done once

    input_idx = jnp.int32(3)
    hidden = 0.1 * jax.random.normal(kh, (n_layers, 1, hidden_sz), jnp.float32)
    cell = 0.1 * jax.random.normal(kc, (n_layers, 1, hidden_sz), jnp.float32)
    encoder_outputs = 0.1 * jax.random.normal(ke, (ATTN_LEN, hidden_sz), jnp.float32)

    # --- single decode step: exact AttentionDecoder.forward semantics ---
    logp, h_new, c_new, attn_w = attention_decoder_forward(
        input_idx, hidden, cell, encoder_outputs, packed)
    jax.block_until_ready((logp, h_new, c_new, attn_w))

    # tolerances account for the approximate (EUP) reciprocal in the softmax denominator
    r_logp, r_h, r_c, r_aw = _reference(input_idx, hidden, cell, encoder_outputs, params)
    assert jnp.allclose(logp, r_logp, atol=2e-4), "log_softmax output mismatch"
    assert jnp.allclose(h_new, r_h, atol=2e-4), "hidden state mismatch"
    assert jnp.allclose(c_new, r_c, atol=2e-4), "cell state mismatch"
    assert jnp.allclose(attn_w, r_aw, atol=5e-4), "attention weights mismatch"

    # --- multi-step teacher-forced decode: whole loop inside ONE kernel, ONE grid step ---
    T = 6
    tok_seq = jax.random.randint(kt, (T,), 0, out_sz, dtype=jnp.int32)
    s_logp, s_h, s_c, s_aw = attention_decoder_decode(
        tok_seq, hidden, cell, encoder_outputs, packed)
    jax.block_until_ready((s_logp, s_h, s_c, s_aw))

    rh, rc = hidden, cell
    for step in range(T):
        rl, rh, rc, raw = _reference(tok_seq[step], rh, rc, encoder_outputs, params)
        assert jnp.allclose(s_logp[step:step + 1], rl, atol=2e-4), f"step {step} logp mismatch"
        assert jnp.allclose(s_aw[step:step + 1], raw, atol=5e-4), f"step {step} attn mismatch"
    assert jnp.allclose(s_h, rh, atol=2e-4), "multi-step hidden mismatch"
    assert jnp.allclose(s_c, rc, atol=2e-4), "multi-step cell mismatch"

    print("KERNEL_OK")
</pallas_src>

<mosaic_0001>
module attributes {stable_mosaic.version = 11 : i64} {
  func.func @_decoder_kernel(%arg0: i32, %arg1: memref<1xi32, #tpu.memory_space<smem>>, %arg2: memref<20x1x128xf32, #tpu.memory_space<vmem>>, %arg3: memref<4x128xf32, #tpu.memory_space<vmem>>, %arg4: memref<128x128xf32, #tpu.memory_space<vmem>>, %arg5: memref<128x896xf32, #tpu.memory_space<vmem>>, %arg6: memref<4x256xf32, #tpu.memory_space<vmem>>, %arg7: memref<8x256xf32, #tpu.memory_space<vmem>>, %arg8: memref<4x128xf32, #tpu.memory_space<vmem>>, %arg9: memref<8x128xf32, #tpu.memory_space<vmem>>, %arg10: memref<8x256xf32, #tpu.memory_space<vmem>>) attributes {dimension_semantics = [#tpu.dimension_semantics<arbitrary>], iteration_bounds = array<i64: 1>, scalar_prefetch = 1 : i64, scratch_operands = 2 : i64, tpu.core_type = #tpu.core_type<tc>, window_params = [{pipeline_mode = #tpu.pipeline_mode<synchronous>, transform_indices = @transform_0, window_bounds = array<i64: 20, 1, 128>}, {pipeline_mode = #tpu.pipeline_mode<synchronous>, transform_indices = @transform_1, window_bounds = array<i64: 4, 128>}, {pipeline_mode = #tpu.pipeline_mode<synchronous>, transform_indices = @transform_2, window_bounds = array<i64: 128, 128>}, {pipeline_mode = #tpu.pipeline_mode<synchronous>, transform_indices = @transform_3, window_bounds = array<i64: 128, 896>}, {pipeline_mode = #tpu.pipeline_mode<synchronous>, transform_indices = @transform_4, window_bounds = array<i64: 4, 256>}, {pipeline_mode = #tpu.pipeline_mode<synchronous>, transform_indices = @transform_5, window_bounds = array<i64: 8, 256>}, {pipeline_mode = #tpu.pipeline_mode<synchronous>, transform_indices = @transform_6, window_bounds = array<i64: 4, 128>}]} {
    %c0 = arith.constant 0 : index
    %c0_0 = arith.constant 0 : index
    %0 = vector.load %arg3[%c0, %c0_0] : memref<4x128xf32, #tpu.memory_space<vmem>>, vector<4x128xf32>
    %c0_1 = arith.constant 0 : index
    %c0_2 = arith.constant 0 : index
    %1 = vector.load %arg8[%c0_1, %c0_2] : memref<4x128xf32, #tpu.memory_space<vmem>>, vector<4x128xf32>
    tpu.vector_store %arg8[%c0_1, %c0_2], %0 {strides = array<i32>} : memref<4x128xf32, #tpu.memory_space<vmem>>, vector<4x128xf32>,
    %cst = arith.constant 0.000000e+00 : f32
    %2 = vector.broadcast %cst : f32 to vector<8x128xf32>
    %c0_3 = arith.constant 0 : index
    %c0_4 = arith.constant 0 : index
    %3 = vector.load %arg9[%c0_3, %c0_4] : memref<8x128xf32, #tpu.memory_space<vmem>>, vector<8x128xf32>
    tpu.vector_store %arg9[%c0_3, %c0_4], %2 {strides = array<i32>} : memref<8x128xf32, #tpu.memory_space<vmem>>, vector<8x128xf32>,
    %c0_5 = arith.constant 0 : index
    %4 = memref.load %arg1[%c0_5] : memref<1xi32, #tpu.memory_space<smem>>
    %5 = arith.index_cast %4 : i32 to index
    %c0_6 = arith.constant 0 : index
    %c0_7 = arith.constant 0 : index
    %6 = vector.load %arg2[%5, %c0_6, %c0_7] : memref<20x1x128xf32, #tpu.memory_space<vmem>>, vector<1x1x128xf32>
    %7 = vector.shape_cast %6 : vector<1x1x128xf32> to vector<1x128xf32>
    %c0_8 = arith.constant 0 : index
    %c0_9 = arith.constant 0 : index
    %8 = vector.load %arg9[%c0_8, %c0_9] : memref<8x128xf32, #tpu.memory_space<vmem>>, vector<1x128xf32>
    tpu.vector_store %arg9[%c0_8, %c0_9], %7 {strides = array<i32>} : memref<8x128xf32, #tpu.memory_space<vmem>>, vector<1x128xf32>,
    %c0_10 = arith.constant 0 : index
    %c0_11 = arith.constant 0 : index
    %9 = vector.load %arg9[%c0_10, %c0_11] : memref<8x128xf32, #tpu.memory_space<vmem>>, vector<8x128xf32>
    %c0_12 = arith.constant 0 : index
    %c0_13 = arith.constant 0 : index
    %10 = vector.load %arg5[%c0_12, %c0_13] : memref<128x896xf32, #tpu.memory_space<vmem>>, vector<128x256xf32>
    %cst_14 = arith.constant dense<0.000000e+00> : vector<8x256xf32>
    %11 = tpu.matmul %9, %10, %cst_14 {dimension_numbers = #tpu.dot_dimension_numbers<[1], [0], [0], [1], [0, 0, 1, 1], [], []>} : vector<8x128xf32>, vector<128x256xf32>, vector<8x256xf32> -> vector<8x256xf32>
    %c0_15 = arith.constant 0 : index
    %c0_16 = arith.constant 0 : index
    %12 = vector.load %arg6[%c0_15, %c0_16] : memref<4x256xf32, #tpu.memory_space<vmem>>, vector<1x256xf32>
    %13 = vector.broadcast %12 : vector<1x256xf32> to vector<8x256xf32>
    %14 = arith.addf %11, %13 : vector<8x256xf32>
    %c0_17 = arith.constant 0 : index
    %c0_18 = arith.constant 0 : index
    %15 = vector.load %arg10[%c0_17, %c0_18] : memref<8x256xf32, #tpu.memory_space<vmem>>, vector<8x256xf32>
    tpu.vector_store %arg10[%c0_17, %c0_18], %14 {strides = array<i32>} : memref<8x256xf32, #tpu.memory_space<vmem>>, vector<8x256xf32>,
    %16 = tpu.iota {dimensions = array<i32: 1>} : vector<1x128xi32>
    %c32_i32 = arith.constant 32 : i32
    %17 = vector.broadcast %c32_i32 : i32 to vector<1x128xi32>
    %18 = arith.cmpi slt, %16, %17 : vector<1x128xi32>
    %19 = arith.extui %18 : vector<1x128xi1> to vector<1x128xi32>
    %20 = arith.sitofp %19 : vector<1x128xi32> to vector<1x128xf32>
    %c1 = arith.constant 1 : index
    %c0_19 = arith.constant 0 : index
    %21 = vector.load %arg6[%c1, %c0_19] : memref<4x256xf32, #tpu.memory_space<vmem>>, vector<1x128xf32>
    %c2 = arith.constant 2 : index
    %c0_20 = arith.constant 0 : index
    %22 = vector.load %arg6[%c2, %c0_20] : memref<4x256xf32, #tpu.memory_space<vmem>>, vector<1x128xf32>
    %c3 = arith.constant 3 : index
    %c0_21 = arith.constant 0 : index
    %23 = vector.load %arg6[%c3, %c0_21] : memref<4x256xf32, #tpu.memory_space<vmem>>, vector<1x128xf32>
    %c0_i32 = arith.constant 0 : i32
    %c1_i32 = arith.constant 1 : i32
    %24 = arith.muli %c0_i32, %c1_i32 : i32
    %c0_i32_22 = arith.constant 0 : i32
    %25 = arith.addi %c0_i32_22, %24 : i32
    %26 = arith.index_cast %25 : i32 to index
    %c0_23 = arith.constant 0 : index
    %27 = vector.load %arg10[%26, %c0_23] : memref<8x256xf32, #tpu.memory_space<vmem>>, vector<1x256xf32>
    %28 = vector.extract_strided_slice %27 {offsets = [0, 0], sizes = [1, 128], strides = [1, 1]} : vector<1x256xf32> to vector<1x128xf32>
    %29 = vector.extract_strided_slice %27 {offsets = [0, 128], sizes = [1, 128], strides = [1, 1]} : vector<1x256xf32> to vector<1x128xf32>
    %c0_24 = arith.constant 0 : index
    %c0_25 = arith.constant 0 : index
    %30 = vector.load %arg8[%c0_24, %c0_25] : memref<4x128xf32, #tpu.memory_space<vmem>>, vector<1x128xf32>
    %c0_26 = arith.constant 0 : index
    %c256 = arith.constant 256 : index
    %31 = vector.load %arg5[%c0_26, %c256] : memref<128x896xf32, #tpu.memory_space<vmem>>, vector<128x128xf32>
    %cst_27 = arith.constant dense<0.000000e+00> : vector<1x128xf32>
    %32 = tpu.matmul %30, %31, %cst_27 {dimension_numbers = #tpu.dot_dimension_numbers<[1], [0], [0], [1], [0, 0, 1, 1], [], []>} : vector<1x128xf32>, vector<128x128xf32>, vector<1x128xf32> -> vector<1x128xf32>
    %33 = arith.addf %28, %32 : vector<1x128xf32>
    %cst_28 = arith.constant dense<0xFF800000> : vector<1xf32>
    %34 = vector.multi_reduction <maximumf>, %33, %cst_28 [1] : vector<1x128xf32> to vector<1xf32>
    %35 = vector.shape_cast %34 : vector<1xf32> to vector<1x1xf32>
    %36 = vector.broadcast %35 : vector<1x1xf32> to vector<1x128xf32>
    %37 = arith.subf %33, %36 : vector<1x128xf32>
    %38 = math.exp %37 : vector<1x128xf32>
    %cst_29 = arith.constant dense<0.000000e+00> : vector<1xf32>
    %39 = vector.multi_reduction <add>, %38, %cst_29 [1] : vector<1x128xf32> to vector<1xf32>
    %40 = vector.shape_cast %39 : vector<1xf32> to vector<1x1xf32>
    %41 = tpu.reciprocal %40 {approx = true} : vector<1x1xf32> -> vector<1x1xf32>
    %42 = vector.broadcast %41 : vector<1x1xf32> to vector<1x128xf32>
    %43 = arith.mulf %38, %42 : vector<1x128xf32>
    %c0_30 = arith.constant 0 : index
    %c0_31 = arith.constant 0 : index
    %44 = vector.load %arg4[%c0_30, %c0_31] : memref<128x128xf32, #tpu.memory_space<vmem>>, vector<128x128xf32>
    %cst_32 = arith.constant dense<0.000000e+00> : vector<1x128xf32>
    %45 = tpu.matmul %43, %44, %cst_32 {dimension_numbers = #tpu.dot_dimension_numbers<[1], [0], [0], [1], [0, 0, 1, 1], [], []>} : vector<1x128xf32>, vector<128x128xf32>, vector<1x128xf32> -> vector<1x128xf32>
    %c0_33 = arith.constant 0 : index
    %c384 = arith.constant 384 : index
    %46 = vector.load %arg5[%c0_33, %c384] : memref<128x896xf32, #tpu.memory_space<vmem>>, vector<128x128xf32>
    %cst_34 = arith.constant dense<0.000000e+00> : vector<1x128xf32>
    %47 = tpu.matmul %45, %46, %cst_34 {dimension_numbers = #tpu.dot_dimension_numbers<[1], [0], [0], [1], [0, 0, 1, 1], [], []>} : vector<1x128xf32>, vector<128x128xf32>, vector<1x128xf32> -> vector<1x128xf32>
    %48 = arith.addf %29, %47 : vector<1x128xf32>
    %c0_35 = arith.constant 0 : index
    %c0_36 = arith.constant 0 : index
    %49 = vector.load %arg8[%c0_35, %c0_36] : memref<4x128xf32, #tpu.memory_space<vmem>>, vector<1x128xf32>
    %c2_37 = arith.constant 2 : index
    %c0_38 = arith.constant 0 : index
    %50 = vector.load %arg8[%c2_37, %c0_38] : memref<4x128xf32, #tpu.memory_space<vmem>>, vector<1x128xf32>
    %c32_i32_39 = arith.constant 32 : i32
    %51 = tpu.dynamic_rotate %49 by %c32_i32_39 dim 1 : vector<1x128xf32>, i32 -> vector<1x128xf32>
    %52 = arith.addf %48, %51 : vector<1x128xf32>
    %c0_40 = arith.constant 0 : index
    %c512 = arith.constant 512 : index
    %53 = vector.load %arg5[%c0_40, %c512] : memref<128x896xf32, #tpu.memory_space<vmem>>, vector<128x128xf32>
    %cst_41 = arith.constant dense<0.000000e+00> : vector<1x128xf32>
    %54 = tpu.matmul %52, %53, %cst_41 {dimension_numbers = #tpu.dot_dimension_numbers<[1], [0], [0], [1], [0, 0, 1, 1], [], []>} : vector<1x128xf32>, vector<128x128xf32>, vector<1x128xf32> -> vector<1x128xf32>
    %55 = arith.addf %54, %21 : vector<1x128xf32>
    %56 = arith.negf %55 : vector<1x128xf32>
    %57 = math.exp %56 : vector<1x128xf32>
    %cst_42 = arith.constant 1.000000e+00 : f32
    %58 = vector.broadcast %cst_42 : f32 to vector<1x128xf32>
    %59 = arith.addf %58, %57 : vector<1x128xf32>
    %60 = arith.divf %58, %59 : vector<1x128xf32>
    %c96_i32 = arith.constant 96 : i32
    %61 = tpu.dynamic_rotate %55 by %c96_i32 dim 1 : vector<1x128xf32>, i32 -> vector<1x128xf32>
    %62 = arith.negf %61 : vector<1x128xf32>
    %63 = math.exp %62 : vector<1x128xf32>
    %cst_43 = arith.constant 1.000000e+00 : f32
    %64 = vector.broadcast %cst_43 : f32 to vector<1x128xf32>
    %65 = arith.addf %64, %63 : vector<1x128xf32>
    %66 = arith.divf %64, %65 : vector<1x128xf32>
    %c64_i32 = arith.constant 64 : i32
    %67 = tpu.dynamic_rotate %55 by %c64_i32 dim 1 : vector<1x128xf32>, i32 -> vector<1x128xf32>
    %68 = math.tanh %67 : vector<1x128xf32>
    %c32_i32_44 = arith.constant 32 : i32
    %69 = tpu.dynamic_rotate %55 by %c32_i32_44 dim 1 : vector<1x128xf32>, i32 -> vector<1x128xf32>
    %70 = arith.negf %69 : vector<1x128xf32>
    %71 = math.exp %70 : vector<1x128xf32>
    %cst_45 = arith.constant 1.000000e+00 : f32
    %72 = vector.broadcast %cst_45 : f32 to vector<1x128xf32>
    %73 = arith.addf %72, %71 : vector<1x128xf32>
    %74 = arith.divf %72, %73 : vector<1x128xf32>
    %75 = arith.mulf %66, %50 : vector<1x128xf32>
    %76 = arith.mulf %60, %68 : vector<1x128xf32>
    %77 = arith.mulf %20, %76 : vector<1x128xf32>
    %78 = arith.addf %75, %77 : vector<1x128xf32>
    %79 = math.tanh %78 : vector<1x128xf32>
    %80 = arith.mulf %74, %79 : vector<1x128xf32>
    %c0_46 = arith.constant 0 : index
    %c0_47 = arith.constant 0 : index
    %81 = vector.load %arg8[%c0_46, %c0_47] : memref<4x128xf32, #tpu.memory_space<vmem>>, vector<1x128xf32>
    tpu.vector_store %arg8[%c0_46, %c0_47], %80 {strides = array<i32>} : memref<4x128xf32, #tpu.memory_space<vmem>>, vector<1x128xf32>,
    %c2_48 = arith.constant 2 : index
    %c0_49 = arith.constant 0 : index
    %82 = vector.load %arg8[%c2_48, %c0_49] : memref<4x128xf32, #tpu.memory_space<vmem>>, vector<1x128xf32>
    tpu.vector_store %arg8[%c2_48, %c0_49], %78 {strides = array<i32>} : memref<4x128xf32, #tpu.memory_space<vmem>>, vector<1x128xf32>,
    %c1_50 = arith.constant 1 : index
    %c0_51 = arith.constant 0 : index
    %83 = vector.load %arg8[%c1_50, %c0_51] : memref<4x128xf32, #tpu.memory_space<vmem>>, vector<1x128xf32>
    %c3_52 = arith.constant 3 : index
    %c0_53 = arith.constant 0 : index
    %84 = vector.load %arg8[%c3_52, %c0_53] : memref<4x128xf32, #tpu.memory_space<vmem>>, vector<1x128xf32>
    %c32_i32_54 = arith.constant 32 : i32
    %85 = tpu.dynamic_rotate %83 by %c32_i32_54 dim 1 : vector<1x128xf32>, i32 -> vector<1x128xf32>
    %86 = arith.addf %80, %85 : vector<1x128xf32>
    %c0_55 = arith.constant 0 : index
    %c640 = arith.constant 640 : index
    %87 = vector.load %arg5[%c0_55, %c640] : memref<128x896xf32, #tpu.memory_space<vmem>>, vector<128x128xf32>
    %cst_56 = arith.constant dense<0.000000e+00> : vector<1x128xf32>
    %88 = tpu.matmul %86, %87, %cst_56 {dimension_numbers = #tpu.dot_dimension_numbers<[1], [0], [0], [1], [0, 0, 1, 1], [], []>} : vector<1x128xf32>, vector<128x128xf32>, vector<1x128xf32> -> vector<1x128xf32>
    %89 = arith.addf %88, %22 : vector<1x128xf32>
    %90 = arith.negf %89 : vector<1x128xf32>
    %91 = math.exp %90 : vector<1x128xf32>
    %cst_57 = arith.constant 1.000000e+00 : f32
    %92 = vector.broadcast %cst_57 : f32 to vector<1x128xf32>
    %93 = arith.addf %92, %91 : vector<1x128xf32>
    %94 = arith.divf %92, %93 : vector<1x128xf32>
    %c96_i32_58 = arith.constant 96 : i32
    %95 = tpu.dynamic_rotate %89 by %c96_i32_58 dim 1 : vector<1x128xf32>, i32 -> vector<1x128xf32>
    %96 = arith.negf %95 : vector<1x128xf32>
    %97 = math.exp %96 : vector<1x128xf32>
    %cst_59 = arith.constant 1.000000e+00 : f32
    %98 = vector.broadcast %cst_59 : f32 to vector<1x128xf32>
    %99 = arith.addf %98, %97 : vector<1x128xf32>
    %100 = arith.divf %98, %99 : vector<1x128xf32>
    %c64_i32_60 = arith.constant 64 : i32
    %101 = tpu.dynamic_rotate %89 by %c64_i32_60 dim 1 : vector<1x128xf32>, i32 -> vector<1x128xf32>
    %102 = math.tanh %101 : vector<1x128xf32>
    %c32_i32_61 = arith.constant 32 : i32
    %103 = tpu.dynamic_rotate %89 by %c32_i32_61 dim 1 : vector<1x128xf32>, i32 -> vector<1x128xf32>
    %104 = arith.negf %103 : vector<1x128xf32>
    %105 = math.exp %104 : vector<1x128xf32>
    %cst_62 = arith.constant 1.000000e+00 : f32
    %106 = vector.broadcast %cst_62 : f32 to vector<1x128xf32>
    %107 = arith.addf %106, %105 : vector<1x128xf32>
    %108 = arith.divf %106, %107 : vector<1x128xf32>
    %109 = arith.mulf %100, %84 : vector<1x128xf32>
    %110 = arith.mulf %94, %102 : vector<1x128xf32>
    %111 = arith.mulf %20, %110 : vector<1x128xf32>
    %112 = arith.addf %109, %111 : vector<1x128xf32>
    %113 = math.tanh %112 : vector<1x128xf32>
    %114 = arith.mulf %108, %113 : vector<1x128xf32>
    %c1_63 = arith.constant 1 : index
    %c0_64 = arith.constant 0 : index
    %115 = vector.load %arg8[%c1_63, %c0_64] : memref<4x128xf32, #tpu.memory_space<vmem>>, vector<1x128xf32>
    tpu.vector_store %arg8[%c1_63, %c0_64], %114 {strides = array<i32>} : memref<4x128xf32, #tpu.memory_space<vmem>>, vector<1x128xf32>,
    %c3_65 = arith.constant 3 : index
    %c0_66 = arith.constant 0 : index
    %116 = vector.load %arg8[%c3_65, %c0_66] : memref<4x128xf32, #tpu.memory_space<vmem>>, vector<1x128xf32>
    tpu.vector_store %arg8[%c3_65, %c0_66], %112 {strides = array<i32>} : memref<4x128xf32, #tpu.memory_space<vmem>>, vector<1x128xf32>,
    %c0_67 = arith.constant 0 : index
    %c768 = arith.constant 768 : index
    %117 = vector.load %arg5[%c0_67, %c768] : memref<128x896xf32, #tpu.memory_space<vmem>>, vector<128x128xf32>
    %cst_68 = arith.constant dense<0.000000e+00> : vector<1x128xf32>
    %118 = tpu.matmul %114, %117, %cst_68 {dimension_numbers = #tpu.dot_dimension_numbers<[1], [0], [0], [1], [0, 0, 1, 1], [], []>} : vector<1x128xf32>, vector<128x128xf32>, vector<1x128xf32> -> vector<1x128xf32>
    %119 = arith.addf %118, %23 : vector<1x128xf32>
    %cst_69 = arith.constant dense<0xFF800000> : vector<1xf32>
    %120 = vector.multi_reduction <maximumf>, %119, %cst_69 [1] : vector<1x128xf32> to vector<1xf32>
    %121 = vector.shape_cast %120 : vector<1xf32> to vector<1x1xf32>
    %122 = vector.broadcast %121 : vector<1x1xf32> to vector<1x128xf32>
    %123 = arith.subf %119, %122 : vector<1x128xf32>
    %124 = math.exp %123 : vector<1x128xf32>
    %cst_70 = arith.constant dense<0.000000e+00> : vector<1xf32>
    %125 = vector.multi_reduction <add>, %124, %cst_70 [1] : vector<1x128xf32> to vector<1xf32>
    %126 = vector.shape_cast %125 : vector<1xf32> to vector<1x1xf32>
    %127 = math.log %126 : vector<1x1xf32>
    %128 = vector.broadcast %127 : vector<1x1xf32> to vector<1x128xf32>
    %129 = arith.subf %123, %128 : vector<1x128xf32>
    %130 = arith.index_cast %25 : i32 to index
    %c0_71 = arith.constant 0 : index
    %131 = vector.load %arg7[%130, %c0_71] : memref<8x256xf32, #tpu.memory_space<vmem>>, vector<1x128xf32>
    tpu.vector_store %arg7[%130, %c0_71], %129 {strides = array<i32>} : memref<8x256xf32, #tpu.memory_space<vmem>>, vector<1x128xf32>,
    %132 = arith.index_cast %25 : i32 to index
    %c128 = arith.constant 128 : index
    %133 = vector.load %arg7[%132, %c128] : memref<8x256xf32, #tpu.memory_space<vmem>>, vector<1x128xf32>
    tpu.vector_store %arg7[%132, %c128], %43 {strides = array<i32>} : memref<8x256xf32, #tpu.memory_space<vmem>>, vector<1x128xf32>,
    %c1_i32_72 = arith.constant 1 : i32
    return
  }
  func.func @transform_0(%arg0: i32, %arg1: memref<1xi32, #tpu.memory_space<smem>>) -> (i32, i32, i32) {
    %c0_i32 = arith.constant 0 : i32
    %c0_i32_0 = arith.constant 0 : i32
    %c0_i32_1 = arith.constant 0 : i32
    %c0_i32_2 = arith.constant 0 : i32
    return %c0_i32, %c0_i32_0, %c0_i32_1 : i32, i32, i32
  }
  func.func @transform_1(%arg0: i32, %arg1: memref<1xi32, #tpu.memory_space<smem>>) -> (i32, i32) {
    %c0_i32 = arith.constant 0 : i32
    %c0_i32_0 = arith.constant 0 : i32
    %c0_i32_1 = arith.constant 0 : i32
    return %c0_i32, %c0_i32_0 : i32, i32
  }
  func.func @transform_2(%arg0: i32, %arg1: memref<1xi32, #tpu.memory_space<smem>>) -> (i32, i32) {
    %c0_i32 = arith.constant 0 : i32
    %c0_i32_0 = arith.constant 0 : i32
    %c0_i32_1 = arith.constant 0 : i32
    return %c0_i32, %c0_i32_0 : i32, i32
  }
  func.func @transform_3(%arg0: i32, %arg1: memref<1xi32, #tpu.memory_space<smem>>) -> (i32, i32) {
    %c0_i32 = arith.constant 0 : i32
    %c0_i32_0 = arith.constant 0 : i32
    %c0_i32_1 = arith.constant 0 : i32
    return %c0_i32, %c0_i32_0 : i32, i32
  }
  func.func @transform_4(%arg0: i32, %arg1: memref<1xi32, #tpu.memory_space<smem>>) -> (i32, i32) {
    %c0_i32 = arith.constant 0 : i32
    %c0_i32_0 = arith.constant 0 : i32
    %c0_i32_1 = arith.constant 0 : i32
    return %c0_i32, %c0_i32_0 : i32, i32
  }
  func.func @transform_5(%arg0: i32, %arg1: memref<1xi32, #tpu.memory_space<smem>>) -> (i32, i32) {
    %c0_i32 = arith.constant 0 : i32
    %c0_i32_0 = arith.constant 0 : i32
    %c0_i32_1 = arith.constant 0 : i32
    return %c0_i32, %c0_i32_0 : i32, i32
  }
  func.func @transform_6(%arg0: i32, %arg1: memref<1xi32, #tpu.memory_space<smem>>) -> (i32, i32) {
    %c0_i32 = arith.constant 0 : i32
    %c0_i32_0 = arith.constant 0 : i32
    %c0_i32_1 = arith.constant 0 : i32
    return %c0_i32, %c0_i32_0 : i32, i32
  }
}

</mosaic_0001>

<llo_original>
// kernel: attention_decoder_decode.1
$region0: #{attention_decoder_decode.1}
  #allocation0 [shape = 'u32[]', space=smem, size = 0x4, offset = 0x4, fixed_abs, tag = 'smem constant byte address 0x4 - core index']
  #allocation1 [shape = 'u32[144,128]{1,0:T(1,128)}', space=vmem, size = 0x12000, scoped, tag = 'internal scratch']
  #allocation2 [shape = 'f32[8,128]{1,0:T(8,128)}', space=vmem, size = 0x1000, scoped, tag = 'scratch operand']
  #allocation3 [shape = 'f32[8,256]{1,0:T(8,128)}', space=vmem, size = 0x2000, scoped, tag = 'scratch operand']
  #allocation4 [shape = 's32[1]{0}', space=sflag, size = 0x4, scoped, tag = 'scoped memory for attention_decoder_decode.1']
  #allocation5 [shape = 's32[1]{0:T(128)S(6)}', space=smem, size = 0x200, scoped, tag = 'prefetched SMEM operand 0']
  %s0 = inlined_call_operand.<no memory space> [shape: s32[1], index: 0, kind: input, shape index: {}]
  %s1 = inlined_call_operand.vmem [shape: f32[20,1,128], index: 1, kind: input, shape index: {}]
  %s2 = inlined_call_operand.vmem [shape: f32[4,128], index: 2, kind: input, shape index: {}]
  %s3 = inlined_call_operand.vmem [shape: f32[128,128], index: 3, kind: input, shape index: {}]
  %s4 = inlined_call_operand.hbm [shape: f32[128,896], index: 4, kind: input, shape index: {}]
  %s5 = inlined_call_operand.vmem [shape: f32[4,256], index: 5, kind: input, shape index: {}]
  %s6 = inlined_call_operand.vmem [shape: f32[8,256], index: 6, kind: output, shape index: {0}]
  %s7 = inlined_call_operand.vmem [shape: f32[4,128], index: 7, kind: output, shape index: {1}]
  %8 = xla_tuple %s6, %s7
  %s9 = sld [smem:[#allocation0]]
  $region42: #{attention_decoder_decode.1} parent=0
    _
  %s11 = ssub.s32 1, %s9
  %s12 = scalar_select 0, %s11, %s9
  %13 = sst [smem:[#allocation5]] %s0
  $region1: #{attention_decoder_decode.1} parent=0
    #allocation6 [shape = 'u8[458752]{0}', space=vmem, size = 0x70000, scoped, tag = 'input window, operand 4, single buffered']
    #allocation7 [shape = 's32[1]{0}', space=sflag, size = 0x4, scoped, tag = 'scoped memory for attention_decoder_decode.1']
    %14 = vsyncpa [#allocation7], 0
    // Predicated region
    $region2: #{attention_decoder_decode.1} parent=1 // pred_check
      _
    $region3: #{attention_decoder_decode.1} parent=1 // pred_check_branch
      %16 = sbr.rel (0) target = $region5
    $region4: #{attention_decoder_decode.1} parent=1 // pred_region
      _
    $region5: #{attention_decoder_decode.1} parent=1 // pred_fallthru
      _
    // Predicated region
    $region6: #{attention_decoder_decode.1} parent=1 // pred_check
      _
    $region7: #{attention_decoder_decode.1} parent=1 // pred_check_branch
      %18 = sbr.rel (0) target = $region9
    $region8: #{attention_decoder_decode.1} parent=1 // pred_region
      _
    $region9: #{attention_decoder_decode.1} parent=1 // pred_fallthru
      _
    // Predicated region
    $region10: #{attention_decoder_decode.1} parent=1 // pred_check
      _
    $region11: #{attention_decoder_decode.1} parent=1 // pred_check_branch
      %20 = sbr.rel (0) target = $region13
    $region12: #{attention_decoder_decode.1} parent=1 // pred_region
      _
    $region13: #{attention_decoder_decode.1} parent=1 // pred_fallthru
      _
    // Predicated region
    $region14: #{attention_decoder_decode.1} parent=1 // pred_check
      _
    $region15: #{attention_decoder_decode.1} parent=1 // pred_check_branch
      %22 = sbr.rel (0) target = $region17
    $region16: #{attention_decoder_decode.1} parent=1 // pred_region
      %s24 = ssub.s32 14336, 14336
      %25 = vsyncadd [#allocation7], %s24
      %s26 = sshll.u32 [#allocation6], 4
      %s27 = int_to_ptr.vmem [resolvable:$true] %s26
      %32 = dma.hbm_to_vmem [thread:$0]  %s4, 14336, %s27, [#allocation7], 896, 896, 56
    $region17: #{attention_decoder_decode.1} parent=1 // pred_fallthru
      _
    // Predicated region
    $region18: #{attention_decoder_decode.1} parent=1 // pred_check
      _
    $region19: #{attention_decoder_decode.1} parent=1 // pred_check_branch
      %34 = sbr.rel (0) target = $region21
    $region20: #{attention_decoder_decode.1} parent=1 // pred_region
      _
    $region21: #{attention_decoder_decode.1} parent=1 // pred_fallthru
      _
    // Predicated region
    $region22: #{attention_decoder_decode.1} parent=1 // pred_check
      _
    $region23: #{attention_decoder_decode.1} parent=1 // pred_check_branch
      %36 = sbr.rel (0) target = $region25
    $region24: #{attention_decoder_decode.1} parent=1 // pred_region
      %37 = dma.done [#allocation7], 14336
    $region25: #{attention_decoder_decode.1} parent=1 // pred_fallthru
      _
    %v38 = vld [vmem:[%s2] sm:$0xf]
    %39 = vst [vmem:[%s7] sm:$0xf] %v38
    %40 = vst [vmem:[#allocation2] sm:$0xff] 0.0
    %s41 = sld [smem:[#allocation5]]
    %s42 = scalar_lea.vmem %s1, %s41
    %v43 = vld [vmem:[%s42] sm:$0x1]
    %44 = vst [vmem:[#allocation2] sm:$0x1] %v43
    %v45 = vld [vmem:[#allocation2] sm:$0xff]
    %v46 = vld [vmem:[#allocation6] sm:$0xff]
    %v47 = vld [vmem:[#allocation6 + $0x8] sm:$0xff]
    %v48 = vld [vmem:[#allocation6 + $0x38] sm:$0xff]
    %v49 = vld [vmem:[#allocation6 + $0x40] sm:$0xff]
    %v50 = vld [vmem:[#allocation6 + $0x70] sm:$0xff]
    %v51 = vld [vmem:[#allocation6 + $0x78] sm:$0xff]
    %v52 = vld [vmem:[#allocation6 + $0xa8] sm:$0xff]
    %v53 = vld [vmem:[#allocation6 + $0xb0] sm:$0xff]
    %v54 = vld [vmem:[#allocation6 + $0xe0] sm:$0xff]
    %v55 = vld [vmem:[#allocation6 + $0xe8] sm:$0xff]
    %v56 = vld [vmem:[#allocation6 + $0x118] sm:$0xff]
    %v57 = vld [vmem:[#allocation6 + $0x120] sm:$0xff]
    %v58 = vld [vmem:[#allocation6 + $0x150] sm:$0xff]
    %v59 = vld [vmem:[#allocation6 + $0x158] sm:$0xff]
    %v60 = vld [vmem:[#allocation6 + $0x188] sm:$0xff]
    %v61 = vld [vmem:[#allocation6 + $0x190] sm:$0xff]
    %v62 = vld [vmem:[#allocation6 + $0x1c0] sm:$0xff]
    %v63 = vld [vmem:[#allocation6 + $0x1c8] sm:$0xff]
    %v64 = vld [vmem:[#allocation6 + $0x1f8] sm:$0xff]
    %v65 = vld [vmem:[#allocation6 + $0x200] sm:$0xff]
    %v66 = vld [vmem:[#allocation6 + $0x230] sm:$0xff]
    %v67 = vld [vmem:[#allocation6 + $0x238] sm:$0xff]
    %v68 = vld [vmem:[#allocation6 + $0x268] sm:$0xff]
    %v69 = vld [vmem:[#allocation6 + $0x270] sm:$0xff]
    %v70 = vld [vmem:[#allocation6 + $0x2a0] sm:$0xff]
    %v71 = vld [vmem:[#allocation6 + $0x2a8] sm:$0xff]
    %v72 = vld [vmem:[#allocation6 + $0x2d8] sm:$0xff]
    %v73 = vld [vmem:[#allocation6 + $0x2e0] sm:$0xff]
    %v74 = vld [vmem:[#allocation6 + $0x310] sm:$0xff]
    %v75 = vld [vmem:[#allocation6 + $0x318] sm:$0xff]
    %v76 = vld [vmem:[#allocation6 + $0x348] sm:$0xff]
    %v77 = vld [vmem:[#allocation6 + $0x350] sm:$0xff]
    %v78 = vld [vmem:[%s5] ss:$4 sm:$0x3]
    %v80 = vlaneseq
    %v81 = vshrl.u32 %v80, 7
    %v82 = vsub.s32 0, %v81
    %v83 = vrot.slane %v78, %v82
    %v84 = vlaneseq
    %v85 = vshrl.u32 %v84, 7
    %v86 = vsub.s32 1, %v85
    %v87 = vrot.slane %v78, %v86
    %90 = vmatprep.subr.mxu0 %v47
    %91 = vmatpush1.msra.mxu0 %v46
    %92 = vmatprep.subr.mxu0 %v49
    %93 = vmatpush1.msra.mxu0 %v48
    %94 = vmatprep.subr.mxu0 %v51
    %95 = vmatpush1.msra.mxu0 %v50
    %96 = vmatprep.subr.mxu0 %v53
    %97 = vmatpush1.msra.mxu0 %v52
    %98 = vmatprep.subr.mxu0 %v55
    %99 = vmatpush1.msra.mxu0 %v54
    %100 = vmatprep.subr.mxu0 %v57
    %101 = vmatpush1.msra.mxu0 %v56
    %102 = vmatprep.subr.mxu0 %v59
    %103 = vmatpush1.msra.mxu0 %v58
    %104 = vmatprep.subr.mxu0 %v61
    %105 = vmatpush1.msra.mxu0 %v60
    %106 = vmatprep.subr.mxu0 %v63
    %107 = vmatpush1.msra.mxu0 %v62
    %108 = vmatprep.subr.mxu0 %v65
    %109 = vmatpush1.msra.mxu0 %v64
    %110 = vmatprep.subr.mxu0 %v67
    %111 = vmatpush1.msra.mxu0 %v66
    %112 = vmatprep.subr.mxu0 %v69
    %113 = vmatpush1.msra.mxu0 %v68
    %114 = vmatprep.subr.mxu0 %v71
    %115 = vmatpush1.msra.mxu0 %v70
    %116 = vmatprep.subr.mxu0 %v73
    %117 = vmatpush1.msra.mxu0 %v72
    %118 = vmatprep.subr.mxu0 %v75
    %119 = vmatpush1.msra.mxu0 %v74
    %120 = vmatprep.subr.mxu0 %v77
    %121 = vmatpush1.msra.mxu0 %v76
    %122 = vmatprep.subr.mxu0 0.0
    %123 = vmatpush1.msra.mxu0 0.0
    %124 = vmatprep.subr.mxu0 0.0
    %125 = vmatpush1.msra.mxu0 0.0
    %126 = vmatprep.subr.mxu0 0.0
    %127 = vmatpush1.msra.mxu0 0.0
    %128 = vmatprep.subr.mxu0 0.0
    %129 = vmatpush1.msra.mxu0 0.0
    %130 = vmatprep.subr.mxu0 0.0
    %131 = vmatpush1.msra.mxu0 0.0
    %132 = vmatprep.subr.mxu0 0.0
    %133 = vmatpush1.msra.mxu0 0.0
    %134 = vmatprep.subr.mxu0 0.0
    %135 = vmatpush1.msra.mxu0 0.0
    %136 = vmatprep.subr.mxu0 0.0
    %137 = vmatpush1.msra.mxu0 0.0
    %138 = vmatprep.subr.mxu0 0.0
    %139 = vmatpush1.msra.mxu0 0.0
    %140 = vmatprep.subr.mxu0 0.0
    %141 = vmatpush1.msra.mxu0 0.0
    %142 = vmatprep.subr.mxu0 0.0
    %143 = vmatpush1.msra.mxu0 0.0
    %144 = vmatprep.subr.mxu0 0.0
    %145 = vmatpush1.msra.mxu0 0.0
    %146 = vmatprep.subr.mxu0 0.0
    %147 = vmatpush1.msra.mxu0 0.0
    %148 = vmatprep.subr.mxu0 0.0
    %149 = vmatpush1.msra.mxu0 0.0
    %150 = vmatprep.subr.mxu0 0.0
    %151 = vmatpush1.msra.mxu0 0.0
    %152 = vmatprep.subr.mxu0 0.0
    %153 = vmatpush1.msra.mxu0 0.0
    %154 = vmatprep.mubr.f32.mxu0 0.0
    %155 = vmatmul.mubr.f32.gmra.mrb[0].mxu0 %v45
    %v156 = vpop.f32.mrb[0].mxu0
    %v157 = vadd.f32 %v83, %v156
    %v158 = vpop.f32.mrb[0].mxu0
    %v159 = vadd.f32 %v87, %v158
    %160 = vdwg.mxu0
    %161 = vst [vmem:[#allocation3] sm:$0xff] %v157
    %162 = vst [vmem:[#allocation3 + $0x8] sm:$0xff] %v159
    %v163 = vlaneseq
    %v164 = vand.u32 %v163, 127
    %vm165 = vcmp.lt.s32.totalorder %v164, 32
    %v166 = vsel %vm165, 1, 0
    %v167 = vcvt.s32.f32 %v166
    %v168 = vld [vmem:[%s5 + $0x1] sm:$0x1]
    %v169 = vld [vmem:[%s5 + $0x2] sm:$0x1]
    %v170 = vld [vmem:[%s5 + $0x3] sm:$0x1]
    %v171 = vld [vmem:[#allocation3] ss:$8 sm:$0x3]
    %v172 = vld [vmem:[%s7] sm:$0x1]
    %v173 = vld [vmem:[#allocation6 + $0x10] sm:$0xff]
    %v174 = vld [vmem:[#allocation6 + $0x48] sm:$0xff]
    %v175 = vld [vmem:[#allocation6 + $0x80] sm:$0xff]
    %v176 = vld [vmem:[#allocation6 + $0xb8] sm:$0xff]
    %v177 = vld [vmem:[#allocation6 + $0xf0] sm:$0xff]
    %v178 = vld [vmem:[#allocation6 + $0x128] sm:$0xff]
    %v179 = vld [vmem:[#allocation6 + $0x160] sm:$0xff]
    %v180 = vld [vmem:[#allocation6 + $0x198] sm:$0xff]
    %v181 = vld [vmem:[#allocation6 + $0x1d0] sm:$0xff]
    %v182 = vld [vmem:[#allocation6 + $0x208] sm:$0xff]
    %v183 = vld [vmem:[#allocation6 + $0x240] sm:$0xff]
    %v184 = vld [vmem:[#allocation6 + $0x278] sm:$0xff]
    %v185 = vld [vmem:[#allocation6 + $0x2b0] sm:$0xff]
    %v186 = vld [vmem:[#allocation6 + $0x2e8] sm:$0xff]
    %v187 = vld [vmem:[#allocation6 + $0x320] sm:$0xff]
    %v188 = vld [vmem:[#allocation6 + $0x358] sm:$0xff]
    %189 = vmatprep.subr.mxu0 0.0
    %190 = vmatpush1.msra.mxu0 %v173
    %191 = vmatprep.subr.mxu0 0.0
    %192 = vmatpush1.msra.mxu0 %v174
    %193 = vmatprep.subr.mxu0 0.0
    %194 = vmatpush1.msra.mxu0 %v175
    %195 = vmatprep.subr.mxu0 0.0
    %196 = vmatpush1.msra.mxu0 %v176
    %197 = vmatprep.subr.mxu0 0.0
    %198 = vmatpush1.msra.mxu0 %v177
    %199 = vmatprep.subr.mxu0 0.0
    %200 = vmatpush1.msra.mxu0 %v178
    %201 = vmatprep.subr.mxu0 0.0
    %202 = vmatpush1.msra.mxu0 %v179
    %203 = vmatprep.subr.mxu0 0.0
    %204 = vmatpush1.msra.mxu0 %v180
    %205 = vmatprep.subr.mxu0 0.0
    %206 = vmatpush1.msra.mxu0 %v181
    %207 = vmatprep.subr.mxu0 0.0
    %208 = vmatpush1.msra.mxu0 %v182
    %209 = vmatprep.subr.mxu0 0.0
    %210 = vmatpush1.msra.mxu0 %v183
    %211 = vmatprep.subr.mxu0 0.0
    %212 = vmatpush1.msra.mxu0 %v184
    %213 = vmatprep.subr.mxu0 0.0
    %214 = vmatpush1.msra.mxu0 %v185
    %215 = vmatprep.subr.mxu0 0.0
    %216 = vmatpush1.msra.mxu0 %v186
    %217 = vmatprep.subr.mxu0 0.0
    %218 = vmatpush1.msra.mxu0 %v187
    %219 = vmatprep.subr.mxu0 0.0
    %220 = vmatpush1.msra.mxu0 %v188
    %221 = vmatprep.subr.mxu0 0.0
    %222 = vmatpush1.msra.mxu0 0.0
    %223 = vmatprep.subr.mxu0 0.0
    %224 = vmatpush1.msra.mxu0 0.0
    %225 = vmatprep.subr.mxu0 0.0
    %226 = vmatpush1.msra.mxu0 0.0
    %227 = vmatprep.subr.mxu0 0.0
    %228 = vmatpush1.msra.mxu0 0.0
    %229 = vmatprep.subr.mxu0 0.0
    %230 = vmatpush1.msra.mxu0 0.0
    %231 = vmatprep.subr.mxu0 0.0
    %232 = vmatpush1.msra.mxu0 0.0
    %233 = vmatprep.subr.mxu0 0.0
    %234 = vmatpush1.msra.mxu0 0.0
    %235 = vmatprep.subr.mxu0 0.0
    %236 = vmatpush1.msra.mxu0 0.0
    %237 = vmatprep.subr.mxu0 0.0
    %238 = vmatpush1.msra.mxu0 0.0
    %239 = vmatprep.subr.mxu0 0.0
    %240 = vmatpush1.msra.mxu0 0.0
    %241 = vmatprep.subr.mxu0 0.0
    %242 = vmatpush1.msra.mxu0 0.0
    %243 = vmatprep.subr.mxu0 0.0
    %244 = vmatpush1.msra.mxu0 0.0
    %245 = vmatprep.subr.mxu0 0.0
    %246 = vmatpush1.msra.mxu0 0.0
    %247 = vmatprep.subr.mxu0 0.0
    %248 = vmatpush1.msra.mxu0 0.0
    %249 = vmatprep.subr.mxu0 0.0
    %250 = vmatpush1.msra.mxu0 0.0
    %251 = vmatprep.subr.mxu0 0.0
    %252 = vmatpush1.msra.mxu0 0.0
    %253 = vmatprep.mubr.f32.mxu0 0.0
    %254 = vmatmul.mubr.f32.gmra.mrb[0].mxu0 %v172
    %v255 = vpop.f32.mrb[0].mxu0
    %v256 = vadd.f32 0.0, %v255
    %v257 = vpop.f32.mrb[0].mxu0
    %258 = vdwg.mxu0
    %v259 = vadd.f32 %v171, %v256
    %vm260 = vcmask 1040384
    %v261 = vsel %vm260, %v259, -inf
    %262 = vmax.xlane.f32.xlu0 %v261
    %v263 = vpop.xlane.xlu0 %262
    %v264 = vsub.f32 %v259, %v263
    %v265 = vmul.f32 %v264, 1.442695
    %v266 = vpow.pop %v265
    %v267 = vsel %vm260, %v266, 0.0
    %268 = vadd.xlane.f32.xlu0 %v267
    %v269 = vpop.xlane.xlu0 %268
    %v270 = vrcp.pop %v269
    %v271 = vmul.f32 %v266, %v270
    %v272 = vld [vmem:[%s3] sm:$0xff]
    %v273 = vld [vmem:[%s3 + $0x8] sm:$0xff]
    %v274 = vld [vmem:[%s3 + $0x10] sm:$0xff]
    %v275 = vld [vmem:[%s3 + $0x18] sm:$0xff]
    %v276 = vld [vmem:[%s3 + $0x20] sm:$0xff]
    %v277 = vld [vmem:[%s3 + $0x28] sm:$0xff]
    %v278 = vld [vmem:[%s3 + $0x30] sm:$0xff]
    %v279 = vld [vmem:[%s3 + $0x38] sm:$0xff]
    %v280 = vld [vmem:[%s3 + $0x40] sm:$0xff]
    %v281 = vld [vmem:[%s3 + $0x48] sm:$0xff]
    %v282 = vld [vmem:[%s3 + $0x50] sm:$0xff]
    %v283 = vld [vmem:[%s3 + $0x58] sm:$0xff]
    %v284 = vld [vmem:[%s3 + $0x60] sm:$0xff]
    %v285 = vld [vmem:[%s3 + $0x68] sm:$0xff]
    %v286 = vld [vmem:[%s3 + $0x70] sm:$0xff]
    %v287 = vld [vmem:[%s3 + $0x78] sm:$0xff]
    %288 = vmatprep.subr.mxu0 0.0
    %289 = vmatpush1.msra.mxu0 %v272
    %290 = vmatprep.subr.mxu0 0.0
    %291 = vmatpush1.msra.mxu0 %v273
    %292 = vmatprep.subr.mxu0 0.0
    %293 = vmatpush1.msra.mxu0 %v274
    %294 = vmatprep.subr.mxu0 0.0
    %295 = vmatpush1.msra.mxu0 %v275
    %296 = vmatprep.subr.mxu0 0.0
    %297 = vmatpush1.msra.mxu0 %v276
    %298 = vmatprep.subr.mxu0 0.0
    %299 = vmatpush1.msra.mxu0 %v277
    %300 = vmatprep.subr.mxu0 0.0
    %301 = vmatpush1.msra.mxu0 %v278
    %302 = vmatprep.subr.mxu0 0.0
    %303 = vmatpush1.msra.mxu0 %v279
    %304 = vmatprep.subr.mxu0 0.0
    %305 = vmatpush1.msra.mxu0 %v280
    %306 = vmatprep.subr.mxu0 0.0
    %307 = vmatpush1.msra.mxu0 %v281
    %308 = vmatprep.subr.mxu0 0.0
    %309 = vmatpush1.msra.mxu0 %v282
    %310 = vmatprep.subr.mxu0 0.0
    %311 = vmatpush1.msra.mxu0 %v283
    %312 = vmatprep.subr.mxu0 0.0
    %313 = vmatpush1.msra.mxu0 %v284
    %314 = vmatprep.subr.mxu0 0.0
    %315 = vmatpush1.msra.mxu0 %v285
    %316 = vmatprep.subr.mxu0 0.0
    %317 = vmatpush1.msra.mxu0 %v286
    %318 = vmatprep.subr.mxu0 0.0
    %319 = vmatpush1.msra.mxu0 %v287
    %320 = vmatprep.subr.mxu0 0.0
    %321 = vmatpush1.msra.mxu0 0.0
    %322 = vmatprep.subr.mxu0 0.0
    %323 = vmatpush1.msra.mxu0 0.0
    %324 = vmatprep.subr.mxu0 0.0
    %325 = vmatpush1.msra.mxu0 0.0
    %326 = vmatprep.subr.mxu0 0.0
    %327 = vmatpush1.msra.mxu0 0.0
    %328 = vmatprep.subr.mxu0 0.0
    %329 = vmatpush1.msra.mxu0 0.0
    %330 = vmatprep.subr.mxu0 0.0
    %331 = vmatpush1.msra.mxu0 0.0
    %332 = vmatprep.subr.mxu0 0.0
    %333 = vmatpush1.msra.mxu0 0.0
    %334 = vmatprep.subr.mxu0 0.0
    %335 = vmatpush1.msra.mxu0 0.0
    %336 = vmatprep.subr.mxu0 0.0
    %337 = vmatpush1.msra.mxu0 0.0
    %338 = vmatprep.subr.mxu0 0.0
    %339 = vmatpush1.msra.mxu0 0.0
    %340 = vmatprep.subr.mxu0 0.0
    %341 = vmatpush1.msra.mxu0 0.0
    %342 = vmatprep.subr.mxu0 0.0
    %343 = vmatpush1.msra.mxu0 0.0
    %344 = vmatprep.subr.mxu0 0.0
    %345 = vmatpush1.msra.mxu0 0.0
    %346 = vmatprep.subr.mxu0 0.0
    %347 = vmatpush1.msra.mxu0 0.0
    %348 = vmatprep.subr.mxu0 0.0
    %349 = vmatpush1.msra.mxu0 0.0
    %350 = vmatprep.subr.mxu0 0.0
    %351 = vmatpush1.msra.mxu0 0.0
    %352 = vmatprep.mubr.f32.mxu0 0.0
    %353 = vmatmul.mubr.f32.gmra.mrb[0].mxu0 %v271
    %v354 = vpop.f32.mrb[0].mxu0
    %v355 = vadd.f32 0.0, %v354
    %v356 = vpop.f32.mrb[0].mxu0
    %357 = vdwg.mxu0
    %v358 = vld [vmem:[#allocation6 + $0x18] sm:$0xff]
    %v359 = vld [vmem:[#allocation6 + $0x50] sm:$0xff]
    %v360 = vld [vmem:[#allocation6 + $0x88] sm:$0xff]
    %v361 = vld [vmem:[#allocation6 + $0xc0] sm:$0xff]
    %v362 = vld [vmem:[#allocation6 + $0xf8] sm:$0xff]
    %v363 = vld [vmem:[#allocation6 + $0x130] sm:$0xff]
    %v364 = vld [vmem:[#allocation6 + $0x168] sm:$0xff]
    %v365 = vld [vmem:[#allocation6 + $0x1a0] sm:$0xff]
    %v366 = vld [vmem:[#allocation6 + $0x1d8] sm:$0xff]
    %v367 = vld [vmem:[#allocation6 + $0x210] sm:$0xff]
    %v368 = vld [vmem:[#allocation6 + $0x248] sm:$0xff]
    %v369 = vld [vmem:[#allocation6 + $0x280] sm:$0xff]
    %v370 = vld [vmem:[#allocation6 + $0x2b8] sm:$0xff]
    %v371 = vld [vmem:[#allocation6 + $0x2f0] sm:$0xff]
    %v372 = vld [vmem:[#allocation6 + $0x328] sm:$0xff]
    %v373 = vld [vmem:[#allocation6 + $0x360] sm:$0xff]
    %374 = vmatprep.subr.mxu0 0.0
    %375 = vmatpush1.msra.mxu0 %v358
    %376 = vmatprep.subr.mxu0 0.0
    %377 = vmatpush1.msra.mxu0 %v359
    %378 = vmatprep.subr.mxu0 0.0
    %379 = vmatpush1.msra.mxu0 %v360
    %380 = vmatprep.subr.mxu0 0.0
    %381 = vmatpush1.msra.mxu0 %v361
    %382 = vmatprep.subr.mxu0 0.0
    %383 = vmatpush1.msra.mxu0 %v362
    %384 = vmatprep.subr.mxu0 0.0
    %385 = vmatpush1.msra.mxu0 %v363
    %386 = vmatprep.subr.mxu0 0.0
    %387 = vmatpush1.msra.mxu0 %v364
    %388 = vmatprep.subr.mxu0 0.0
    %389 = vmatpush1.msra.mxu0 %v365
    %390 = vmatprep.subr.mxu0 0.0
    %391 = vmatpush1.msra.mxu0 %v366
    %392 = vmatprep.subr.mxu0 0.0
    %393 = vmatpush1.msra.mxu0 %v367
    %394 = vmatprep.subr.mxu0 0.0
    %395 = vmatpush1.msra.mxu0 %v368
    %396 = vmatprep.subr.mxu0 0.0
    %397 = vmatpush1.msra.mxu0 %v369
    %398 = vmatprep.subr.mxu0 0.0
    %399 = vmatpush1.msra.mxu0 %v370
    %400 = vmatprep.subr.mxu0 0.0
    %401 = vmatpush1.msra.mxu0 %v371
    %402 = vmatprep.subr.mxu0 0.0
    %403 = vmatpush1.msra.mxu0 %v372
    %404 = vmatprep.subr.mxu0 0.0
    %405 = vmatpush1.msra.mxu0 %v373
    %406 = vmatprep.subr.mxu0 0.0
    %407 = vmatpush1.msra.mxu0 0.0
    %408 = vmatprep.subr.mxu0 0.0
    %409 = vmatpush1.msra.mxu0 0.0
    %410 = vmatprep.subr.mxu0 0.0
    %411 = vmatpush1.msra.mxu0 0.0
    %412 = vmatprep.subr.mxu0 0.0
    %413 = vmatpush1.msra.mxu0 0.0
    %414 = vmatprep.subr.mxu0 0.0
    %415 = vmatpush1.msra.mxu0 0.0
    %416 = vmatprep.subr.mxu0 0.0
    %417 = vmatpush1.msra.mxu0 0.0
    %418 = vmatprep.subr.mxu0 0.0
    %419 = vmatpush1.msra.mxu0 0.0
    %420 = vmatprep.subr.mxu0 0.0
    %421 = vmatpush1.msra.mxu0 0.0
    %422 = vmatprep.subr.mxu0 0.0
    %423 = vmatpush1.msra.mxu0 0.0
    %424 = vmatprep.subr.mxu0 0.0
    %425 = vmatpush1.msra.mxu0 0.0
    %426 = vmatprep.subr.mxu0 0.0
    %427 = vmatpush1.msra.mxu0 0.0
    %428 = vmatprep.subr.mxu0 0.0
    %429 = vmatpush1.msra.mxu0 0.0
    %430 = vmatprep.subr.mxu0 0.0
    %431 = vmatpush1.msra.mxu0 0.0
    %432 = vmatprep.subr.mxu0 0.0
    %433 = vmatpush1.msra.mxu0 0.0
    %434 = vmatprep.subr.mxu0 0.0
    %435 = vmatpush1.msra.mxu0 0.0
    %436 = vmatprep.subr.mxu0 0.0
    %437 = vmatpush1.msra.mxu0 0.0
    %438 = vmatprep.mubr.f32.mxu0 0.0
    %439 = vmatmul.mubr.f32.gmra.mrb[0].mxu0 %v355
    %v440 = vpop.f32.mrb[0].mxu0
    %v441 = vadd.f32 0.0, %v440
    %v442 = vpop.f32.mrb[0].mxu0
    %443 = vdwg.mxu0
    %v445 = vrot.slane %v171, 1
    %v447 = vadd.f32 %v445, %v441
    %v448 = vld [vmem:[%s7 + $0x2] sm:$0x1]
    %449 = vrot.lane.b32.xlu0 %v172, 32
    %v450 = vpop.permute.xlu0 %449
    %v451 = vadd.f32 %v447, %v450
    %v452 = vld [vmem:[#allocation6 + $0x20] sm:$0xff]
    %v453 = vld [vmem:[#allocation6 + $0x58] sm:$0xff]
    %v454 = vld [vmem:[#allocation6 + $0x90] sm:$0xff]
    %v455 = vld [vmem:[#allocation6 + $0xc8] sm:$0xff]
    %v456 = vld [vmem:[#allocation6 + $0x100] sm:$0xff]
    %v457 = vld [vmem:[#allocation6 + $0x138] sm:$0xff]
    %v458 = vld [vmem:[#allocation6 + $0x170] sm:$0xff]
    %v459 = vld [vmem:[#allocation6 + $0x1a8] sm:$0xff]
    %v460 = vld [vmem:[#allocation6 + $0x1e0] sm:$0xff]
    %v461 = vld [vmem:[#allocation6 + $0x218] sm:$0xff]
    %v462 = vld [vmem:[#allocation6 + $0x250] sm:$0xff]
    %v463 = vld [vmem:[#allocation6 + $0x288] sm:$0xff]
    %v464 = vld [vmem:[#allocation6 + $0x2c0] sm:$0xff]
    %v465 = vld [vmem:[#allocation6 + $0x2f8] sm:$0xff]
    %v466 = vld [vmem:[#allocation6 + $0x330] sm:$0xff]
    %v467 = vld [vmem:[#allocation6 + $0x368] sm:$0xff]
    %468 = vmatprep.subr.mxu0 0.0
    %469 = vmatpush1.msra.mxu0 %v452
    %470 = vmatprep.subr.mxu0 0.0
    %471 = vmatpush1.msra.mxu0 %v453
    %472 = vmatprep.subr.mxu0 0.0
    %473 = vmatpush1.msra.mxu0 %v454
    %474 = vmatprep.subr.mxu0 0.0
    %475 = vmatpush1.msra.mxu0 %v455
    %476 = vmatprep.subr.mxu0 0.0
    %477 = vmatpush1.msra.mxu0 %v456
    %478 = vmatprep.subr.mxu0 0.0
    %479 = vmatpush1.msra.mxu0 %v457
    %480 = vmatprep.subr.mxu0 0.0
    %481 = vmatpush1.msra.mxu0 %v458
    %482 = vmatprep.subr.mxu0 0.0
    %483 = vmatpush1.msra.mxu0 %v459
    %484 = vmatprep.subr.mxu0 0.0
    %485 = vmatpush1.msra.mxu0 %v460
    %486 = vmatprep.subr.mxu0 0.0
    %487 = vmatpush1.msra.mxu0 %v461
    %488 = vmatprep.subr.mxu0 0.0
    %489 = vmatpush1.msra.mxu0 %v462
    %490 = vmatprep.subr.mxu0 0.0
    %491 = vmatpush1.msra.mxu0 %v463
    %492 = vmatprep.subr.mxu0 0.0
    %493 = vmatpush1.msra.mxu0 %v464
    %494 = vmatprep.subr.mxu0 0.0
    %495 = vmatpush1.msra.mxu0 %v465
    %496 = vmatprep.subr.mxu0 0.0
    %497 = vmatpush1.msra.mxu0 %v466
    %498 = vmatprep.subr.mxu0 0.0
    %499 = vmatpush1.msra.mxu0 %v467
    %500 = vmatprep.subr.mxu0 0.0
    %501 = vmatpush1.msra.mxu0 0.0
    %502 = vmatprep.subr.mxu0 0.0
    %503 = vmatpush1.msra.mxu0 0.0
    %504 = vmatprep.subr.mxu0 0.0
    %505 = vmatpush1.msra.mxu0 0.0
    %506 = vmatprep.subr.mxu0 0.0
    %507 = vmatpush1.msra.mxu0 0.0
    %508 = vmatprep.subr.mxu0 0.0
    %509 = vmatpush1.msra.mxu0 0.0
    %510 = vmatprep.subr.mxu0 0.0
    %511 = vmatpush1.msra.mxu0 0.0
    %512 = vmatprep.subr.mxu0 0.0
    %513 = vmatpush1.msra.mxu0 0.0
    %514 = vmatprep.subr.mxu0 0.0
    %515 = vmatpush1.msra.mxu0 0.0
    %516 = vmatprep.subr.mxu0 0.0
    %517 = vmatpush1.msra.mxu0 0.0
    %518 = vmatprep.subr.mxu0 0.0
    %519 = vmatpush1.msra.mxu0 0.0
    %520 = vmatprep.subr.mxu0 0.0
    %521 = vmatpush1.msra.mxu0 0.0
    %522 = vmatprep.subr.mxu0 0.0
    %523 = vmatpush1.msra.mxu0 0.0
    %524 = vmatprep.subr.mxu0 0.0
    %525 = vmatpush1.msra.mxu0 0.0
    %526 = vmatprep.subr.mxu0 0.0
    %527 = vmatpush1.msra.mxu0 0.0
    %528 = vmatprep.subr.mxu0 0.0
    %529 = vmatpush1.msra.mxu0 0.0
    %530 = vmatprep.subr.mxu0 0.0
    %531 = vmatpush1.msra.mxu0 0.0
    %532 = vmatprep.mubr.f32.mxu0 0.0
    %533 = vmatmul.mubr.f32.gmra.mrb[0].mxu0 %v451
    %v534 = vpop.f32.mrb[0].mxu0
    %v535 = vadd.f32 %v168, %v534
    %v536 = vpop.f32.mrb[0].mxu0
    %537 = vdwg.mxu0
    %v538 = vxor.u32 %v535, 2147483648
    %v539 = vmul.f32 %v538, 1.442695
    %v540 = vpow.pop %v539
    %v541 = vadd.f32 %v540, 1.0
    %v542 = vrcp.pop %v541
    %v543 = vmul.f32 1.0, %v542
    %544 = vrot.lane.b32.xlu0 %v535, 96
    %v545 = vpop.permute.xlu0 %544
    %v546 = vxor.u32 %v545, 2147483648
    %v547 = vmul.f32 %v546, 1.442695
    %v548 = vpow.pop %v547
    %v549 = vadd.f32 %v548, 1.0
    %v550 = vrcp.pop %v549
    %v551 = vmul.f32 1.0, %v550
    %552 = vrot.lane.b32.xlu0 %v535, 64
    %v553 = vpop.permute.xlu0 %552
    %v554 = vtanh.pop %v553
    %555 = vrot.lane.b32.xlu0 %v535, 32
    %v556 = vpop.permute.xlu0 %555
    %v557 = vxor.u32 %v556, 2147483648
    %v558 = vmul.f32 %v557, 1.442695
    %v559 = vpow.pop %v558
    %v560 = vadd.f32 %v559, 1.0
    %v561 = vrcp.pop %v560
    %v562 = vmul.f32 1.0, %v561
    %v563 = vmul.f32 %v551, %v448
    %v564 = vmul.f32 %v543, %v554
    %v565 = vmul.f32 %v167, %v564
    %v566 = vadd.f32 %v563, %v565
    %v567 = vtanh.pop %v566
    %v568 = vmul.f32 %v562, %v567
    %569 = vst [vmem:[%s7] sm:$0x1] %v568
    %570 = vst [vmem:[%s7 + $0x2] sm:$0x1] %v566
    %v571 = vld [vmem:[%s7 + $0x1] sm:$0x1]
    %v572 = vld [vmem:[%s7 + $0x3] sm:$0x1]
    %573 = vrot.lane.b32.xlu0 %v571, 32
    %v574 = vpop.permute.xlu0 %573
    %v575 = vadd.f32 %v568, %v574
    %v576 = vld [vmem:[#allocation6 + $0x28] sm:$0xff]
    %v577 = vld [vmem:[#allocation6 + $0x60] sm:$0xff]
    %v578 = vld [vmem:[#allocation6 + $0x98] sm:$0xff]
    %v579 = vld [vmem:[#allocation6 + $0xd0] sm:$0xff]
    %v580 = vld [vmem:[#allocation6 + $0x108] sm:$0xff]
    %v581 = vld [vmem:[#allocation6 + $0x140] sm:$0xff]
    %v582 = vld [vmem:[#allocation6 + $0x178] sm:$0xff]
    %v583 = vld [vmem:[#allocation6 + $0x1b0] sm:$0xff]
    %v584 = vld [vmem:[#allocation6 + $0x1e8] sm:$0xff]
    %v585 = vld [vmem:[#allocation6 + $0x220] sm:$0xff]
    %v586 = vld [vmem:[#allocation6 + $0x258] sm:$0xff]
    %v587 = vld [vmem:[#allocation6 + $0x290] sm:$0xff]
    %v588 = vld [vmem:[#allocation6 + $0x2c8] sm:$0xff]
    %v589 = vld [vmem:[#allocation6 + $0x300] sm:$0xff]
    %v590 = vld [vmem:[#allocation6 + $0x338] sm:$0xff]
    %v591 = vld [vmem:[#allocation6 + $0x370] sm:$0xff]
    %592 = vmatprep.subr.mxu0 0.0
    %593 = vmatpush1.msra.mxu0 %v576
    %594 = vmatprep.subr.mxu0 0.0
    %595 = vmatpush1.msra.mxu0 %v577
    %596 = vmatprep.subr.mxu0 0.0
    %597 = vmatpush1.msra.mxu0 %v578
    %598 = vmatprep.subr.mxu0 0.0
    %599 = vmatpush1.msra.mxu0 %v579
    %600 = vmatprep.subr.mxu0 0.0
    %601 = vmatpush1.msra.mxu0 %v580
    %602 = vmatprep.subr.mxu0 0.0
    %603 = vmatpush1.msra.mxu0 %v581
    %604 = vmatprep.subr.mxu0 0.0
    %605 = vmatpush1.msra.mxu0 %v582
    %606 = vmatprep.subr.mxu0 0.0
    %607 = vmatpush1.msra.mxu0 %v583
    %608 = vmatprep.subr.mxu0 0.0
    %609 = vmatpush1.msra.mxu0 %v584
    %610 = vmatprep.subr.mxu0 0.0
    %611 = vmatpush1.msra.mxu0 %v585
    %612 = vmatprep.subr.mxu0 0.0
    %613 = vmatpush1.msra.mxu0 %v586
    %614 = vmatprep.subr.mxu0 0.0
    %615 = vmatpush1.msra.mxu0 %v587
    %616 = vmatprep.subr.mxu0 0.0
    %617 = vmatpush1.msra.mxu0 %v588
    %618 = vmatprep.subr.mxu0 0.0
    %619 = vmatpush1.msra.mxu0 %v589
    %620 = vmatprep.subr.mxu0 0.0
    %621 = vmatpush1.msra.mxu0 %v590
    %622 = vmatprep.subr.mxu0 0.0
    %623 = vmatpush1.msra.mxu0 %v591
    %624 = vmatprep.subr.mxu0 0.0
    %625 = vmatpush1.msra.mxu0 0.0
    %626 = vmatprep.subr.mxu0 0.0
    %627 = vmatpush1.msra.mxu0 0.0
    %628 = vmatprep.subr.mxu0 0.0
    %629 = vmatpush1.msra.mxu0 0.0
    %630 = vmatprep.subr.mxu0 0.0
    %631 = vmatpush1.msra.mxu0 0.0
    %632 = vmatprep.subr.mxu0 0.0
    %633 = vmatpush1.msra.mxu0 0.0
    %634 = vmatprep.subr.mxu0 0.0
    %635 = vmatpush1.msra.mxu0 0.0
    %636 = vmatprep.subr.mxu0 0.0
    %637 = vmatpush1.msra.mxu0 0.0
    %638 = vmatprep.subr.mxu0 0.0
    %639 = vmatpush1.msra.mxu0 0.0
    %640 = vmatprep.subr.mxu0 0.0
    %641 = vmatpush1.msra.mxu0 0.0
    %642 = vmatprep.subr.mxu0 0.0
    %643 = vmatpush1.msra.mxu0 0.0
    %644 = vmatprep.subr.mxu0 0.0
    %645 = vmatpush1.msra.mxu0 0.0
    %646 = vmatprep.subr.mxu0 0.0
    %647 = vmatpush1.msra.mxu0 0.0
    %648 = vmatprep.subr.mxu0 0.0
    %649 = vmatpush1.msra.mxu0 0.0
    %650 = vmatprep.subr.mxu0 0.0
    %651 = vmatpush1.msra.mxu0 0.0
    %652 = vmatprep.subr.mxu0 0.0
    %653 = vmatpush1.msra.mxu0 0.0
    %654 = vmatprep.subr.mxu0 0.0
    %655 = vmatpush1.msra.mxu0 0.0
    %656 = vmatprep.mubr.f32.mxu0 0.0
    %657 = vmatmul.mubr.f32.gmra.mrb[0].mxu0 %v575
    %v658 = vpop.f32.mrb[0].mxu0
    %v659 = vadd.f32 %v169, %v658
    %v660 = vpop.f32.mrb[0].mxu0
    %661 = vdwg.mxu0
    %v662 = vxor.u32 %v659, 2147483648
    %v663 = vmul.f32 %v662, 1.442695
    %v664 = vpow.pop %v663
    %v665 = vadd.f32 %v664, 1.0
    %v666 = vrcp.pop %v665
    %v667 = vmul.f32 1.0, %v666
    %668 = vrot.lane.b32.xlu0 %v659, 96
    %v669 = vpop.permute.xlu0 %668
    %v670 = vxor.u32 %v669, 2147483648
    %v671 = vmul.f32 %v670, 1.442695
    %v672 = vpow.pop %v671
    %v673 = vadd.f32 %v672, 1.0
    %v674 = vrcp.pop %v673
    %v675 = vmul.f32 1.0, %v674
    %676 = vrot.lane.b32.xlu0 %v659, 64
    %v677 = vpop.permute.xlu0 %676
    %v678 = vtanh.pop %v677
    %679 = vrot.lane.b32.xlu0 %v659, 32
    %v680 = vpop.permute.xlu0 %679
    %v681 = vxor.u32 %v680, 2147483648
    %v682 = vmul.f32 %v681, 1.442695
    %v683 = vpow.pop %v682
    %v684 = vadd.f32 %v683, 1.0
    %v685 = vrcp.pop %v684
    %v686 = vmul.f32 1.0, %v685
    %v687 = vmul.f32 %v675, %v572
    %v688 = vmul.f32 %v667, %v678
    %v689 = vmul.f32 %v167, %v688
    %v690 = vadd.f32 %v687, %v689
    %v691 = vtanh.pop %v690
    %v692 = vmul.f32 %v686, %v691
    %693 = vst [vmem:[%s7 + $0x1] sm:$0x1] %v692
    %694 = vst [vmem:[%s7 + $0x3] sm:$0x1] %v690
    %v695 = vld [vmem:[#allocation6 + $0x30] sm:$0xff]
    %v696 = vld [vmem:[#allocation6 + $0x68] sm:$0xff]
    %v697 = vld [vmem:[#allocation6 + $0xa0] sm:$0xff]
    %v698 = vld [vmem:[#allocation6 + $0xd8] sm:$0xff]
    %v699 = vld [vmem:[#allocation6 + $0x110] sm:$0xff]
    %v700 = vld [vmem:[#allocation6 + $0x148] sm:$0xff]
    %v701 = vld [vmem:[#allocation6 + $0x180] sm:$0xff]
    %v702 = vld [vmem:[#allocation6 + $0x1b8] sm:$0xff]
    %v703 = vld [vmem:[#allocation6 + $0x1f0] sm:$0xff]
    %v704 = vld [vmem:[#allocation6 + $0x228] sm:$0xff]
    %v705 = vld [vmem:[#allocation6 + $0x260] sm:$0xff]
    %v706 = vld [vmem:[#allocation6 + $0x298] sm:$0xff]
    %v707 = vld [vmem:[#allocation6 + $0x2d0] sm:$0xff]
    %v708 = vld [vmem:[#allocation6 + $0x308] sm:$0xff]
    %v709 = vld [vmem:[#allocation6 + $0x340] sm:$0xff]
    %v710 = vld [vmem:[#allocation6 + $0x378] sm:$0xff]
    %711 = vmatprep.subr.mxu0 0.0
    %712 = vmatpush1.msra.mxu0 %v695
    %713 = vmatprep.subr.mxu0 0.0
    %714 = vmatpush1.msra.mxu0 %v696
    %715 = vmatprep.subr.mxu0 0.0
    %716 = vmatpush1.msra.mxu0 %v697
    %717 = vmatprep.subr.mxu0 0.0
    %718 = vmatpush1.msra.mxu0 %v698
    %719 = vmatprep.subr.mxu0 0.0
    %720 = vmatpush1.msra.mxu0 %v699
    %721 = vmatprep.subr.mxu0 0.0
    %722 = vmatpush1.msra.mxu0 %v700
    %723 = vmatprep.subr.mxu0 0.0
    %724 = vmatpush1.msra.mxu0 %v701
    %725 = vmatprep.subr.mxu0 0.0
    %726 = vmatpush1.msra.mxu0 %v702
    %727 = vmatprep.subr.mxu0 0.0
    %728 = vmatpush1.msra.mxu0 %v703
    %729 = vmatprep.subr.mxu0 0.0
    %730 = vmatpush1.msra.mxu0 %v704
    %731 = vmatprep.subr.mxu0 0.0
    %732 = vmatpush1.msra.mxu0 %v705
    %733 = vmatprep.subr.mxu0 0.0
    %734 = vmatpush1.msra.mxu0 %v706
    %735 = vmatprep.subr.mxu0 0.0
    %736 = vmatpush1.msra.mxu0 %v707
    %737 = vmatprep.subr.mxu0 0.0
    %738 = vmatpush1.msra.mxu0 %v708
    %739 = vmatprep.subr.mxu0 0.0
    %740 = vmatpush1.msra.mxu0 %v709
    %741 = vmatprep.subr.mxu0 0.0
    %742 = vmatpush1.msra.mxu0 %v710
    %743 = vmatprep.subr.mxu0 0.0
    %744 = vmatpush1.msra.mxu0 0.0
    %745 = vmatprep.subr.mxu0 0.0
    %746 = vmatpush1.msra.mxu0 0.0
    %747 = vmatprep.subr.mxu0 0.0
    %748 = vmatpush1.msra.mxu0 0.0
    %749 = vmatprep.subr.mxu0 0.0
    %750 = vmatpush1.msra.mxu0 0.0
    %751 = vmatprep.subr.mxu0 0.0
    %752 = vmatpush1.msra.mxu0 0.0
    %753 = vmatprep.subr.mxu0 0.0
    %754 = vmatpush1.msra.mxu0 0.0
    %755 = vmatprep.subr.mxu0 0.0
    %756 = vmatpush1.msra.mxu0 0.0
    %757 = vmatprep.subr.mxu0 0.0
    %758 = vmatpush1.msra.mxu0 0.0
    %759 = vmatprep.subr.mxu0 0.0
    %760 = vmatpush1.msra.mxu0 0.0
    %761 = vmatprep.subr.mxu0 0.0
    %762 = vmatpush1.msra.mxu0 0.0
    %763 = vmatprep.subr.mxu0 0.0
    %764 = vmatpush1.msra.mxu0 0.0
    %765 = vmatprep.subr.mxu0 0.0
    %766 = vmatpush1.msra.mxu0 0.0
    %767 = vmatprep.subr.mxu0 0.0
    %768 = vmatpush1.msra.mxu0 0.0
    %769 = vmatprep.subr.mxu0 0.0
    %770 = vmatpush1.msra.mxu0 0.0
    %771 = vmatprep.subr.mxu0 0.0
    %772 = vmatpush1.msra.mxu0 0.0
    %773 = vmatprep.subr.mxu0 0.0
    %774 = vmatpush1.msra.mxu0 0.0
    %775 = vmatprep.mubr.f32.mxu0 0.0
    %776 = vmatmul.mubr.f32.gmra.mrb[0].mxu0 %v692
    %v777 = vpop.f32.mrb[0].mxu0
    %v778 = vadd.f32 %v170, %v777
    %v779 = vpop.f32.mrb[0].mxu0
    %780 = vdwg.mxu0
    %v781 = vsel %vm260, %v778, -inf
    %782 = vmax.xlane.f32.xlu0 %v781
    %v783 = vpop.xlane.xlu0 %782
    %v784 = vsub.f32 %v778, %v783
    %v785 = vmul.f32 %v784, 1.442695
    %v786 = vpow.pop %v785
    %v787 = vsel %vm260, %v786, 0.0
    %788 = vadd.xlane.f32.xlu0 %v787
    %v789 = vpop.xlane.xlu0 %788
    %v790 = vlog2.pop %v789
    %v791 = vmul.f32 %v790, 0.6931472
    %v792 = vsub.f32 %v784, %v791
    %793 = vst [vmem:[%s6] sm:$0x1] %v792
    %794 = vst [vmem:[%s6 + $0x8] sm:$0x1] %v271
    // Predicated region
    $region26: #{attention_decoder_decode.1} parent=1 // pred_check
      _
    $region27: #{attention_decoder_decode.1} parent=1 // pred_check_branch
      %796 = sbr.rel (0) target = $region29
    $region28: #{attention_decoder_decode.1} parent=1 // pred_region
      _
    $region29: #{attention_decoder_decode.1} parent=1 // pred_fallthru
      _
    // Predicated region
    $region30: #{attention_decoder_decode.1} parent=1 // pred_check
      _
    $region31: #{attention_decoder_decode.1} parent=1 // pred_check_branch
      %798 = sbr.rel (0) target = $region33
    $region32: #{attention_decoder_decode.1} parent=1 // pred_region
      _
    $region33: #{attention_decoder_decode.1} parent=1 // pred_fallthru
      _
    // Predicated region
    $region34: #{attention_decoder_decode.1} parent=1 // pred_check
      _
    $region35: #{attention_decoder_decode.1} parent=1 // pred_check_branch
      %800 = sbr.rel (0) target = $region37
    $region36: #{attention_decoder_decode.1} parent=1 // pred_region
      _
    $region37: #{attention_decoder_decode.1} parent=1 // pred_fallthru
      _
    // Predicated region
    $region38: #{attention_decoder_decode.1} parent=1 // pred_check
      _
    $region39: #{attention_decoder_decode.1} parent=1 // pred_check_branch
      %802 = sbr.rel (0) target = $region41
    $region40: #{attention_decoder_decode.1} parent=1 // pred_region
      _
    $region41: #{attention_decoder_decode.1} parent=1 // pred_fallthru
      _
    %803 = vsyncpa [#allocation7], 1

</llo_original>
